<compile_context>
chip_gen: v7x
topology: tpu7x:2x2x1
jax: 0.10.0
libtpu: 0.0.40
codegen_flags: <defaults>
</compile_context>

<pallas_src>
import functools

import jax
import jax.numpy as jnp
from jax.experimental import pallas as pl
from jax.experimental.pallas import tpu as pltpu

_MIB = 1024 * 1024


def _rmsnorm_kernel(x_ref, w_ref, o_ref, *, eps, type_as_dtype):
    # Hot path: square, mean over lane axis, rsqrt, scale, weight multiply.
    x32 = x_ref[...].astype(jnp.float32)                  # x.float()
    ms = jnp.mean(x32 * x32, axis=-1, keepdims=True)      # x.pow(2).mean(-1, keepdim=True)
    inv = jax.lax.rsqrt(ms + eps)                          # torch.rsqrt(... + eps)
    normed = x32 * inv
    if type_as_dtype is not None:
        # Matches torch's `.type_as(x)` precision loss for non-f32 inputs.
        normed = normed.astype(type_as_dtype)
    # Weight was pre-cast to the output dtype in the wrapper; its (1, dim)
    # block has a constant index_map so it stays VMEM-resident.
    o_ref[...] = normed.astype(o_ref.dtype) * w_ref[...]


def _vmem_capacity_and_cores():
    """Per-TensorCore VMEM capacity (bytes) and TC count; conservative fallback."""
    vmem = None
    try:
        info = pltpu.get_tpu_info()
        vmem = int(info.vmem_capacity_bytes)
    except Exception:
        vmem = None
    if not vmem or vmem <= 0:
        vmem = 64 * _MIB  # v7x-safe lowest common denominator
    # v7x signature: 64 MiB VMEM per TC and 2 TensorCores per chip;
    # v5e/v6e: 128 MiB VMEM, single TC.
    num_cores = 2 if vmem <= 64 * _MIB else 1
    return vmem, num_cores


def rmsnorm(x, weight, eps, *, out_dtype=None):
    """x: [..., dim]; weight: [dim]. Matches torch RMSNorm.forward.

    out_dtype: optional override of the output dtype.  Default (None) keeps
    torch semantics (promote_types(x, weight)).  Passing e.g. x.dtype for a
    bf16 x with f32 weight halves the HBM write stream (~1.5x speedup on this
    bandwidth-bound kernel) at the cost of diverging from torch's output dtype.
    """
    orig_shape = x.shape
    dim = orig_shape[-1]
    rows = 1
    for s in orig_shape[:-1]:
        rows *= s

    if out_dtype is None:
        out_dtype = jnp.promote_types(x.dtype, weight.dtype)

    x2d = x.reshape(rows, dim)
    # Pre-cast weight once in the wrapper; no per-step cast on the VPU.
    w2d = weight.astype(out_dtype).reshape(1, dim)

    x_bytes = jnp.dtype(x.dtype).itemsize
    o_bytes = jnp.dtype(out_dtype).itemsize

    # ---- Generation-aware VMEM budget -------------------------------------
    vmem_cap, num_cores = _vmem_capacity_and_cores()
    # Leave headroom below physical VMEM for the weight block / compiler
    # scratch: 48 MiB limit on v7x (64 MiB/TC), 112 MiB on v5e/v6e (128 MiB).
    vmem_limit = int(min(vmem_cap - 16 * _MIB, (7 * vmem_cap) // 8))
    # Budget for the double-buffered row blocks: ~40 MiB (v7x) / ~96 MiB (v5e/v6e).
    vmem_budget = int(min(vmem_limit - 8 * _MIB, 96 * _MIB))

    # ---- VMEM-budgeted row tile --------------------------------------------
    # Per-row live bytes: double-buffered input + output blocks, plus one f32
    # whole-block temporary.  For f32 x the .float() cast is a no-op and the
    # square fuses into the reduce; non-f32 x additionally keeps the f32
    # upcast copy live.
    temp_bytes = 4 if x.dtype == jnp.float32 else 8
    per_row_bytes = dim * (2 * x_bytes + 2 * o_bytes + temp_bytes)

    # Sublane packing: 8 rows per vreg tile for 32-bit, 16 for 16-bit,
    # 32 for 8-bit dtypes.  Align block_rows so no partially-masked sublane
    # tiles / relayouts appear on the input or output blocks.
    align = max(8, 32 // min(x_bytes, o_bytes))

    block_rows = max(align, vmem_budget // per_row_bytes)
    block_rows = (block_rows // align) * align
    rows_padded = ((rows + align - 1) // align) * align
    block_rows = min(block_rows, rows_padded)

    # Force >= 2 grid steps per TensorCore (>= 4 total on v7x megacore) so
    # each core still double-buffers its fetch/writeback DMAs; only when the
    # row count actually allows aligned blocks of that many steps.
    min_steps = 2 * num_cores
    if pl.cdiv(rows, block_rows) < min_steps and rows >= min_steps * align:
        block_rows = max(
            align, ((pl.cdiv(rows, min_steps) + align - 1) // align) * align
        )
    grid = (pl.cdiv(rows, block_rows),)

    cost = pl.CostEstimate(
        flops=4 * rows * dim,
        transcendentals=rows,
        bytes_accessed=rows * dim * (x_bytes + o_bytes) + dim * o_bytes,
    )

    type_as_dtype = None if x.dtype == jnp.float32 else x.dtype

    # TODO(synk): for dim < 128 a lane-dense repacking (multiple rows per lane
    # tile, or padding dim to 128) would avoid masked vst.msk stores;
    # production dims (multiples of 128) are unaffected.
    # NOTE: if xprof ever shows exposed input-DMA gaps for very small blocks,
    # bump the input BlockSpec to pipeline_mode=pl.Buffered(3); not needed at
    # the block sizes this budget produces.
    out = pl.pallas_call(
        functools.partial(_rmsnorm_kernel, eps=eps, type_as_dtype=type_as_dtype),
        out_shape=jax.ShapeDtypeStruct((rows, dim), out_dtype),
        grid_spec=pltpu.PrefetchScalarGridSpec(
            num_scalar_prefetch=0,
            grid=grid,
            in_specs=[
                pl.BlockSpec((block_rows, dim), lambda i: (i, 0)),
                pl.BlockSpec((1, dim), lambda i: (0, 0)),
            ],
            out_specs=pl.BlockSpec((block_rows, dim), lambda i: (i, 0)),
        ),
        compiler_params=pltpu.CompilerParams(
            dimension_semantics=("parallel",),
            vmem_limit_bytes=vmem_limit,
        ),
        cost_estimate=cost,
    )(x2d, w2d)
    return out.reshape(orig_shape[:-1] + (dim,))


def rmsnorm_ref(x, weight, eps):
    x32 = x.astype(jnp.float32)
    normed = x32 * jax.lax.rsqrt(jnp.mean(x32 * x32, axis=-1, keepdims=True) + eps)
    return normed.astype(x.dtype) * weight


if __name__ == "__main__":
    eps = 1e-5
    key = jax.random.PRNGKey(0)

    # Main check: f32 input, f32 weight (nn.Parameter(torch.ones(dim))).
    batch, seq, dim = 2, 8, 32
    x = jax.random.normal(key, (batch, seq, dim), dtype=jnp.float32)
    weight = jnp.ones((dim,), dtype=jnp.float32)

    y = rmsnorm(x, weight, eps)
    jax.block_until_ready(y)
    y_ref = rmsnorm_ref(x, weight, eps)
    assert y.shape == x.shape and y.dtype == y_ref.dtype
    assert jnp.allclose(y, y_ref, atol=1e-5, rtol=1e-5)

    # Ragged-row check: rows not a multiple of the block (exercises cdiv grid
    # + masked last block).
    k2 = jax.random.PRNGKey(1)
    x2 = jax.random.normal(k2, (3, 5, dim), dtype=jnp.float32)
    y2 = rmsnorm(x2, weight, eps)
    jax.block_until_ready(y2)
    assert jnp.allclose(y2, rmsnorm_ref(x2, weight, eps), atol=1e-5, rtol=1e-5)

    # Mixed-dtype check: bf16 x with f32 weight (torch's .type_as path;
    # output promoted to f32 like torch).
    x3 = x.astype(jnp.bfloat16)
    y3 = rmsnorm(x3, weight, eps)
    jax.block_until_ready(y3)
    y3_ref = rmsnorm_ref(x3, weight, eps)
    assert y3.dtype == y3_ref.dtype
    assert jnp.allclose(y3, y3_ref, atol=1e-2, rtol=1e-2)

    # Optional low-HBM-traffic mode: bf16 output for bf16 input (semantics
    # flag, diverges from torch's promoted dtype on purpose).
    y4 = rmsnorm(x3, weight, eps, out_dtype=jnp.bfloat16)
    jax.block_until_ready(y4)
    assert y4.dtype == jnp.bfloat16
    assert jnp.allclose(y4.astype(jnp.float32), y3_ref, atol=2e-2, rtol=2e-2)

    print("KERNEL_OK")
</pallas_src>

<mosaic_0001>
module attributes {stable_mosaic.version = 11 : i64} {
  func.func @_rmsnorm_kernel(%arg0: i32, %arg1: memref<16x32xf32, #tpu.memory_space<vmem>>, %arg2: memref<1x32xf32, #tpu.memory_space<vmem>>, %arg3: memref<16x32xf32, #tpu.memory_space<vmem>>) attributes {dimension_semantics = [#tpu.dimension_semantics<parallel>], iteration_bounds = array<i64: 1>, scalar_prefetch = 0 : i64, scratch_operands = 0 : i64, tpu.core_type = #tpu.core_type<tc>, window_params = [{transform_indices = @transform_0, window_bounds = array<i64: 16, 32>}, {pipeline_mode = #tpu.pipeline_mode<synchronous>, transform_indices = @transform_1, window_bounds = array<i64: 1, 32>}, {transform_indices = @transform_2, window_bounds = array<i64: 16, 32>}]} {
    %c0 = arith.constant 0 : index
    %c0_0 = arith.constant 0 : index
    %0 = vector.load %arg1[%c0, %c0_0] : memref<16x32xf32, #tpu.memory_space<vmem>>, vector<16x32xf32>
    %1 = arith.mulf %0, %0 : vector<16x32xf32>
    %cst = arith.constant dense<0.000000e+00> : vector<16xf32>
    %2 = vector.multi_reduction <add>, %1, %cst [1] : vector<16x32xf32> to vector<16xf32>
    %3 = vector.shape_cast %2 : vector<16xf32> to vector<16x1xf32>
    %cst_1 = arith.constant 3.200000e+01 : f32
    %4 = vector.broadcast %cst_1 : f32 to vector<16x1xf32>
    %5 = arith.divf %3, %4 : vector<16x1xf32>
    %cst_2 = arith.constant 9.99999974E-6 : f32
    %6 = vector.broadcast %cst_2 : f32 to vector<16x1xf32>
    %7 = arith.addf %5, %6 : vector<16x1xf32>
    %8 = math.rsqrt %7 : vector<16x1xf32>
    %9 = vector.broadcast %8 : vector<16x1xf32> to vector<16x32xf32>
    %10 = arith.mulf %0, %9 : vector<16x32xf32>
    %c0_3 = arith.constant 0 : index
    %c0_4 = arith.constant 0 : index
    %11 = vector.load %arg2[%c0_3, %c0_4] : memref<1x32xf32, #tpu.memory_space<vmem>>, vector<1x32xf32>
    %12 = vector.broadcast %11 : vector<1x32xf32> to vector<16x32xf32>
    %13 = arith.mulf %10, %12 : vector<16x32xf32>
    %c0_5 = arith.constant 0 : index
    %c0_6 = arith.constant 0 : index
    %14 = vector.load %arg3[%c0_5, %c0_6] : memref<16x32xf32, #tpu.memory_space<vmem>>, vector<16x32xf32>
    tpu.vector_store %arg3[%c0_5, %c0_6], %13 {strides = array<i32>} : memref<16x32xf32, #tpu.memory_space<vmem>>, vector<16x32xf32>,
    return
  }
  func.func @transform_0(%arg0: i32) -> (i32, i32) {
    %c0_i32 = arith.constant 0 : i32
    %c0_i32_0 = arith.constant 0 : i32
    return %arg0, %c0_i32 : i32, i32
  }
  func.func @transform_1(%arg0: i32) -> (i32, i32) {
    %c0_i32 = arith.constant 0 : i32
    %c0_i32_0 = arith.constant 0 : i32
    %c0_i32_1 = arith.constant 0 : i32
    return %c0_i32, %c0_i32_0 : i32, i32
  }
  func.func @transform_2(%arg0: i32) -> (i32, i32) {
    %c0_i32 = arith.constant 0 : i32
    %c0_i32_0 = arith.constant 0 : i32
    return %arg0, %c0_i32 : i32, i32
  }
}

</mosaic_0001>

<llo_original>
// kernel: tpu_custom_call.1
$region0: #{tpu_custom_call.1}
  #allocation0 [shape = 'u32[]', space=smem, size = 0x4, offset = 0x4, fixed_abs, tag = 'smem constant byte address 0x4 - core index']
  #allocation1 [shape = 'u32[144,128]{1,0:T(1,128)}', space=vmem, size = 0x12000, scoped, tag = 'internal scratch']
  %s0 = inlined_call_operand.hbm [shape: f32[16,32], index: 0, kind: input, shape index: {}]
  %s1 = inlined_call_operand.vmem [shape: f32[1,32], index: 1, kind: input, shape index: {}]
  %s2 = inlined_call_operand.hbm [shape: f32[16,32], index: 2, kind: output, shape index: {}]
  %s3 = sld [smem:[#allocation0]]
  $region22: #{tpu_custom_call.1} parent=0
    _
  %s5 = ssub.s32 1, %s3
  %s6 = scalar_select 0, %s5, %s3
  $region1: #{tpu_custom_call.1} parent=0
    #allocation2 [shape = 'u8[8192]{0}', space=vmem, size = 0x2000, scoped, tag = 'input window, operand 0, single buffered']
    #allocation3 [shape = 's32[1]{0}', space=sflag, size = 0x4, scoped, tag = 'scoped memory for tpu_custom_call.1']
    #allocation4 [shape = 's32[1]{0}', space=sflag, size = 0x4, scoped, tag = 'scoped memory for tpu_custom_call.1']
    #allocation5 [shape = 'u8[8192]{0}', space=vmem, size = 0x2000, scoped, tag = 'output window, operand 0, single buffered']
    %7 = vsyncpa [#allocation3], 0
    %8 = vsyncpa [#allocation4], 0
    // Predicated region
    $region2: #{tpu_custom_call.1} parent=1 // pred_check
      _
    $region3: #{tpu_custom_call.1} parent=1 // pred_check_branch
      %10 = sbr.rel (0) target = $region5
    $region4: #{tpu_custom_call.1} parent=1 // pred_region
      %s12 = ssub.s32 256, 256
      %13 = vsyncadd [#allocation3], %s12
      %s14 = sshll.u32 [#allocation2], 4
      %s15 = int_to_ptr.vmem [resolvable:$true] %s14
      %20 = dma.hbm_to_vmem [thread:$0]  %s0, 256, %s15, [#allocation3], 128, 128, 8
    $region5: #{tpu_custom_call.1} parent=1 // pred_fallthru
      _
    // Predicated region
    $region6: #{tpu_custom_call.1} parent=1 // pred_check
      _
    $region7: #{tpu_custom_call.1} parent=1 // pred_check_branch
      %22 = sbr.rel (0) target = $region9
    $region8: #{tpu_custom_call.1} parent=1 // pred_region
      _
    $region9: #{tpu_custom_call.1} parent=1 // pred_fallthru
      _
    // Predicated region
    $region10: #{tpu_custom_call.1} parent=1 // pred_check
      _
    $region11: #{tpu_custom_call.1} parent=1 // pred_check_branch
      %24 = sbr.rel (0) target = $region13
    $region12: #{tpu_custom_call.1} parent=1 // pred_region
      %25 = dma.done [#allocation3], 256
    $region13: #{tpu_custom_call.1} parent=1 // pred_fallthru
      _
    %v26 = vld [vmem:[#allocation2] sm:$0xff]
    %v27 = vld [vmem:[#allocation2 + $0x8] sm:$0xff]
    %v28 = vmul.f32 %v26, %v26
    %v29 = vmul.f32 %v27, %v27
    %vm30 = vcmask 261120
    %v31 = vsel %vm30, %v28, 0.0
    %32 = vadd.xlane.f32.xlu0 %v31
    %v33 = vpop.xlane.xlu0 %32
    %v34 = vsel %vm30, %v29, 0.0
    %35 = vadd.xlane.f32.xlu0 %v34
    %v36 = vpop.xlane.xlu0 %35
    %v37 = vrcp.pop 32.0
    %v38 = vmul.f32 %v33, %v37
    %v39 = vmul.f32 %v36, %v37
    %v40 = vadd.f32 %v38, 1e-05
    %v41 = vadd.f32 %v39, 1e-05
    %v42 = vrsqrt.pop %v40
    %v43 = vrsqrt.pop %v41
    %v44 = vmul.f32 %v26, %v42
    %v45 = vmul.f32 %v27, %v43
    %v46 = vld [vmem:[%s1] sm:$0x1]
    %v48 = vlaneseq
    %v49 = vshrl.u32 %v48, 7
    %v50 = vsub.s32 0, %v49
    %v51 = vrot.slane %v46, %v50
    %v53 = vmul.f32 %v44, %v51
    %v54 = vmul.f32 %v45, %v51
    %55 = vst.msk [vmem:[#allocation5] sm:$0xff] %vm30, %v53
    %56 = vst.msk [vmem:[#allocation5 + $0x8] sm:$0xff] %vm30, %v54
    // Predicated region
    $region14: #{tpu_custom_call.1} parent=1 // pred_check
      _
    $region15: #{tpu_custom_call.1} parent=1 // pred_check_branch
      %58 = sbr.rel (0) target = $region17
    $region16: #{tpu_custom_call.1} parent=1 // pred_region
      %s60 = ssub.s32 256, 256
      %61 = vsyncadd [#allocation4], %s60
      %s62 = sshll.u32 [#allocation5], 4
      %s63 = int_to_ptr.vmem [resolvable:$true] %s62
      %68 = dma.vmem_to_hbm [thread:$0]  %s63, 256, %s2, [#allocation4], 128, 128, 8
    $region17: #{tpu_custom_call.1} parent=1 // pred_fallthru
      _
    // Predicated region
    $region18: #{tpu_custom_call.1} parent=1 // pred_check
      _
    $region19: #{tpu_custom_call.1} parent=1 // pred_check_branch
      %70 = sbr.rel (0) target = $region21
    $region20: #{tpu_custom_call.1} parent=1 // pred_region
      %71 = dma.done [#allocation4], 256
    $region21: #{tpu_custom_call.1} parent=1 // pred_fallthru
      _
    %72 = vsyncpa [#allocation3], 1
    %73 = vsyncpa [#allocation4], 1

</llo_original>
